<compile_context>
chip_gen: v6e
topology: v6e:2x2x1
jax: 0.10.0
libtpu: 0.0.40
codegen_flags: <defaults>
</compile_context>

<pallas_src>
import jax
import jax.numpy as jnp
from jax import lax
from jax.experimental import pallas as pl
from jax.experimental.pallas import tpu as pltpu

TEMP = 0.07
_NT_DIMS = (((1,), (1,)), ((), ()))   # contract dim 1 of both operands: A @ B.T


def dtl_loss_kernel(x_ref, out_ref):
    # x_ref: (3B, D) = [feat_v ; feat_targets ; feat] stacked along rows.
    b = x_ref.shape[0] // 3
    fv  = x_ref[:b, :]     # feat_v                      (B,  D)
    cat = x_ref[b:, :]     # [feat_targets ; feat]        (2B, D)

    inv_temp = jnp.float32(1.0 / TEMP)

    # Single fused MXU matmul: columns [:B] are fv @ feat_targets.T (teacher
    # logits, == sim_v2t_m; sim_t2v_m is its transpose), columns [B:] are
    # fv @ feat.T (student logits, == sim_v2t; sim_t2v is its transpose).
    sims = lax.dot_general(fv, cat, _NT_DIMS,
                           preferred_element_type=jnp.float32) * inv_temp  # (B, 2B)
    s_m = sims[:, :b]
    s   = sims[:, b:]

    def axis_term(axis):
        # sum_axis( softmax(s_m, axis) * log_softmax(s, axis) )
        #   = sum_axis( softmax(s_m, axis) * z ) - lse        (softmax sums to 1)
        #   = sum_axis(exp(zm) * z) / sum_axis(exp(zm)) - lse
        zm  = s_m - jnp.max(s_m, axis=axis, keepdims=True)
        em  = jnp.exp(zm)
        z   = s - jnp.max(s, axis=axis, keepdims=True)
        lse = jnp.log(jnp.sum(jnp.exp(z), axis=axis, keepdims=True))
        num = jnp.sum(em * z, axis=axis, keepdims=True)
        den = jnp.sum(em, axis=axis, keepdims=True)
        return num / den - lse            # exact divide (only B values)

    row_terms = axis_term(1)   # (B, 1): per-row   v2t terms
    col_terms = axis_term(0)   # (1, B): per-column t2v terms (transposed view)

    # loss = 0.5 * (loss_v2t + loss_t2v) = -(0.5 / B) * (sum(rows) + sum(cols))
    out_ref[0] = jnp.float32(-0.5 / b) * (jnp.sum(row_terms) + jnp.sum(col_terms))


def dtl_loss(feat_targets, feat, feat_v):
    """feat_targets, feat, feat_v: (B, D) arrays. Returns scalar f32 loss.

    bf16 inputs are fed to the MXU as-is (f32 accumulation); softmax math is
    always f32 inside the kernel.
    """
    B, D = feat_targets.shape
    assert feat.shape == (B, D) and feat_v.shape == (B, D)

    # One stacked operand -> one HBM->VMEM DMA in the kernel prologue
    # (wrapper-side layout plumbing, not compute).
    stacked = jnp.concatenate([feat_v, feat_targets, feat], axis=0)   # (3B, D)

    # VMEM budget (bytes, f32): stacked input + fused (B, 2B) logits + a
    # handful of (B, B)/(B, 2B) softmax temporaries; 2x headroom, 4 MiB floor.
    needed = 4 * (3 * B * D + 2 * (2 * B * B) + 8 * B * B)
    vmem_limit = max(4 << 20, 2 * needed)
    if vmem_limit > (64 << 20):   # v7x physical VMEM per TensorCore
        # TODO(synk): add a row-tiled grid (parallel dimension_semantics for
        # v7x's 2 TCs) with an online axis=0 softmax before scaling B this far.
        raise ValueError(
            f"B={B}, D={D} exceeds the grid-less VMEM budget; add a row-tiled grid.")

    out = pl.pallas_call(
        dtl_loss_kernel,
        out_shape=jax.ShapeDtypeStruct((1,), jnp.float32),
        # Whole-array VMEM residency, no grid: no double-buffering / pipeline
        # prologue for a single-shot kernel.
        in_specs=[pl.BlockSpec(memory_space=pltpu.VMEM)],
        out_specs=pl.BlockSpec(memory_space=pltpu.SMEM),
        compiler_params=pltpu.CompilerParams(vmem_limit_bytes=vmem_limit),
    )(stacked)
    return out[0]


def dtl_loss_ref(feat_targets, feat, feat_v):
    """Pure-JAX reference mirroring the PyTorch forward (exact f32 matmuls)."""
    hp = jax.lax.Precision.HIGHEST
    sim_v2t_m = jnp.matmul(feat_v, feat_targets.T, precision=hp) / TEMP
    sim_t2v_m = jnp.matmul(feat_targets, feat_v.T, precision=hp) / TEMP
    sim_v2t_targets = jax.nn.softmax(sim_v2t_m, axis=1)
    sim_t2v_targets = jax.nn.softmax(sim_t2v_m, axis=1)
    sim_v2t = jnp.matmul(feat_v, feat.T, precision=hp) / TEMP
    sim_t2v = jnp.matmul(feat, feat_v.T, precision=hp) / TEMP
    loss_v2t = -jnp.sum(jax.nn.log_softmax(sim_v2t, axis=1) * sim_v2t_targets, axis=1).mean()
    loss_t2v = -jnp.sum(jax.nn.log_softmax(sim_t2v, axis=1) * sim_t2v_targets, axis=1).mean()
    return (loss_v2t + loss_t2v) / 2


if __name__ == "__main__":
    B, D = 8, 32
    key = jax.random.PRNGKey(0)
    k1, k2, k3 = jax.random.split(key, 3)

    def _unit(k):
        # cosine_sim in the reference module assumes L2-normalized features.
        x = jax.random.normal(k, (B, D), dtype=jnp.float32)
        return x / jnp.linalg.norm(x, axis=-1, keepdims=True)

    # DtlLoss has no learnable parameters (only temp=0.07); inputs are the
    # three feature matrices.
    feat_targets = _unit(k1)
    feat         = _unit(k2)
    feat_v       = _unit(k3)

    loss = jax.block_until_ready(dtl_loss(feat_targets, feat, feat_v))
    ref  = jax.block_until_ready(dtl_loss_ref(feat_targets, feat, feat_v))

    # Exact division restored -> remaining deviation is only f32 matmul
    # accumulation ordering (MXU vs XLA), well under 1e-4.
    assert jnp.allclose(loss, ref, rtol=1e-4, atol=1e-4), (loss, ref)
    print("KERNEL_OK")
</pallas_src>

<mosaic_0001>
module attributes {stable_mosaic.version = 11 : i64} {
  func.func @dtl_loss_kernel(%arg0: memref<24x32xf32, #tpu.memory_space<vmem>>, %arg1: memref<1xf32, #tpu.memory_space<smem>>) attributes {dimension_semantics = [], scalar_prefetch = 0 : i64, scratch_operands = 0 : i64, tpu.core_type = #tpu.core_type<tc>} {
    %c0 = arith.constant 0 : index
    %c0_0 = arith.constant 0 : index
    %0 = vector.load %arg0[%c0, %c0_0] : memref<24x32xf32, #tpu.memory_space<vmem>>, vector<8x32xf32>
    %c8 = arith.constant 8 : index
    %c0_1 = arith.constant 0 : index
    %1 = vector.load %arg0[%c8, %c0_1] : memref<24x32xf32, #tpu.memory_space<vmem>>, vector<16x32xf32>
    %cst = arith.constant dense<0.000000e+00> : vector<8x16xf32>
    %2 = tpu.matmul %0, %1, %cst {dimension_numbers = #tpu.dot_dimension_numbers<[1], [1], [0], [0], [0, 0, 1, 0], [], []>} : vector<8x32xf32>, vector<16x32xf32>, vector<8x16xf32> -> vector<8x16xf32>
    %cst_2 = arith.constant 14.2857141 : f32
    %3 = vector.broadcast %cst_2 : f32 to vector<8x16xf32>
    %4 = arith.mulf %2, %3 : vector<8x16xf32>
    %5 = vector.extract_strided_slice %4 {offsets = [0, 0], sizes = [8, 8], strides = [1, 1]} : vector<8x16xf32> to vector<8x8xf32>
    %6 = vector.extract_strided_slice %4 {offsets = [0, 8], sizes = [8, 8], strides = [1, 1]} : vector<8x16xf32> to vector<8x8xf32>
    %cst_3 = arith.constant dense<0xFF800000> : vector<8xf32>
    %7 = vector.multi_reduction <maximumf>, %5, %cst_3 [1] : vector<8x8xf32> to vector<8xf32>
    %8 = vector.shape_cast %7 : vector<8xf32> to vector<8x1xf32>
    %9 = vector.broadcast %8 : vector<8x1xf32> to vector<8x8xf32>
    %10 = arith.subf %5, %9 : vector<8x8xf32>
    %11 = math.exp %10 : vector<8x8xf32>
    %cst_4 = arith.constant dense<0xFF800000> : vector<8xf32>
    %12 = vector.multi_reduction <maximumf>, %6, %cst_4 [1] : vector<8x8xf32> to vector<8xf32>
    %13 = vector.shape_cast %12 : vector<8xf32> to vector<8x1xf32>
    %14 = vector.broadcast %13 : vector<8x1xf32> to vector<8x8xf32>
    %15 = arith.subf %6, %14 : vector<8x8xf32>
    %16 = math.exp %15 : vector<8x8xf32>
    %cst_5 = arith.constant dense<0.000000e+00> : vector<8xf32>
    %17 = vector.multi_reduction <add>, %16, %cst_5 [1] : vector<8x8xf32> to vector<8xf32>
    %18 = vector.shape_cast %17 : vector<8xf32> to vector<8x1xf32>
    %19 = math.log %18 : vector<8x1xf32>
    %20 = arith.mulf %11, %15 : vector<8x8xf32>
    %cst_6 = arith.constant dense<0.000000e+00> : vector<8xf32>
    %21 = vector.multi_reduction <add>, %20, %cst_6 [1] : vector<8x8xf32> to vector<8xf32>
    %22 = vector.shape_cast %21 : vector<8xf32> to vector<8x1xf32>
    %cst_7 = arith.constant dense<0.000000e+00> : vector<8xf32>
    %23 = vector.multi_reduction <add>, %11, %cst_7 [1] : vector<8x8xf32> to vector<8xf32>
    %24 = vector.shape_cast %23 : vector<8xf32> to vector<8x1xf32>
    %25 = arith.divf %22, %24 : vector<8x1xf32>
    %26 = arith.subf %25, %19 : vector<8x1xf32>
    %cst_8 = arith.constant dense<0xFF800000> : vector<8xf32>
    %27 = vector.multi_reduction <maximumf>, %5, %cst_8 [0] : vector<8x8xf32> to vector<8xf32>
    %28 = vector.shape_cast %27 : vector<8xf32> to vector<1x8xf32>
    %29 = vector.broadcast %28 : vector<1x8xf32> to vector<8x8xf32>
    %30 = arith.subf %5, %29 : vector<8x8xf32>
    %31 = math.exp %30 : vector<8x8xf32>
    %cst_9 = arith.constant dense<0xFF800000> : vector<8xf32>
    %32 = vector.multi_reduction <maximumf>, %6, %cst_9 [0] : vector<8x8xf32> to vector<8xf32>
    %33 = vector.shape_cast %32 : vector<8xf32> to vector<1x8xf32>
    %34 = vector.broadcast %33 : vector<1x8xf32> to vector<8x8xf32>
    %35 = arith.subf %6, %34 : vector<8x8xf32>
    %36 = math.exp %35 : vector<8x8xf32>
    %cst_10 = arith.constant dense<0.000000e+00> : vector<8xf32>
    %37 = vector.multi_reduction <add>, %36, %cst_10 [0] : vector<8x8xf32> to vector<8xf32>
    %38 = vector.shape_cast %37 : vector<8xf32> to vector<1x8xf32>
    %39 = math.log %38 : vector<1x8xf32>
    %40 = arith.mulf %31, %35 : vector<8x8xf32>
    %cst_11 = arith.constant dense<0.000000e+00> : vector<8xf32>
    %41 = vector.multi_reduction <add>, %40, %cst_11 [0] : vector<8x8xf32> to vector<8xf32>
    %42 = vector.shape_cast %41 : vector<8xf32> to vector<1x8xf32>
    %cst_12 = arith.constant dense<0.000000e+00> : vector<8xf32>
    %43 = vector.multi_reduction <add>, %31, %cst_12 [0] : vector<8x8xf32> to vector<8xf32>
    %44 = vector.shape_cast %43 : vector<8xf32> to vector<1x8xf32>
    %45 = arith.divf %42, %44 : vector<1x8xf32>
    %46 = arith.subf %45, %39 : vector<1x8xf32>
    %47 = vector.shape_cast %26 : vector<8x1xf32> to vector<1x8x1xf32>
    %cst_13 = arith.constant dense<0.000000e+00> : vector<1xf32>
    %48 = vector.multi_reduction <add>, %47, %cst_13 [1, 2] : vector<1x8x1xf32> to vector<1xf32>
    %49 = vector.shape_cast %48 : vector<1xf32> to vector<1x1x1xf32>
    %50 = vector.extract %49[0, 0, 0] : f32 from vector<1x1x1xf32>
    %51 = vector.shape_cast %46 : vector<1x8xf32> to vector<1x1x8xf32>
    %cst_14 = arith.constant dense<0.000000e+00> : vector<1xf32>
    %52 = vector.multi_reduction <add>, %51, %cst_14 [1, 2] : vector<1x1x8xf32> to vector<1xf32>
    %53 = vector.shape_cast %52 : vector<1xf32> to vector<1x1x1xf32>
    %54 = vector.extract %53[0, 0, 0] : f32 from vector<1x1x1xf32>
    %55 = arith.addf %50, %54 : f32
    %cst_15 = arith.constant -6.250000e-02 : f32
    %56 = arith.mulf %cst_15, %55 : f32
    %c0_16 = arith.constant 0 : index
    %57 = memref.load %arg1[%c0_16] : memref<1xf32, #tpu.memory_space<smem>>
    memref.store %56, %arg1[%c0_16] : memref<1xf32, #tpu.memory_space<smem>>
    return
  }
}

</mosaic_0001>

<llo_original>
// kernel: tpu_custom_call.1
$region0: #{tpu_custom_call.1}
  #allocation0 [shape = 'u32[]', space=smem, size = 0x4, offset = 0x4, fixed_abs, tag = 'smem constant byte address 0x4 - core index']
  #allocation1 [shape = 'u32[144,128]{1,0:T(1,128)}', space=vmem, size = 0x12000, scoped, tag = 'internal scratch']
  %s0 = inlined_call_operand.hbm [shape: f32[24,32], index: 0, kind: input, shape index: {}]
  %s1 = inlined_call_operand.hbm [shape: f32[1], index: 1, kind: output, shape index: {}]
  %s2 = sld [smem:[#allocation0]]
  $region18: #{tpu_custom_call.1} parent=0
    _
  %s4 = ssub.s32 1, %s2
  %s5 = scalar_select 0, %s4, %s2
  $region1: #{tpu_custom_call.1} parent=0
    #allocation2 [shape = 'u8[12288]{0}', space=vmem, size = 0x3000, scoped, tag = 'input window, operand 0, single buffered']
    #allocation3 [shape = 's32[1]{0}', space=sflag, size = 0x4, scoped, tag = 'scoped memory for tpu_custom_call.1']
    #allocation4 [shape = 's32[1]{0}', space=sflag, size = 0x4, scoped, tag = 'scoped memory for tpu_custom_call.1']
    #allocation5 [shape = 'u8[512]{0}', space=smem, size = 0x200, scoped, tag = 'output window, operand 0, single buffered']
    %6 = vsyncpa [#allocation3], 0
    %7 = vsyncpa [#allocation4], 0
    // Predicated region
    $region2: #{tpu_custom_call.1} parent=1 // pred_check
      _
    $region3: #{tpu_custom_call.1} parent=1 // pred_check_branch
      %9 = sbr.rel (0) target = $region5
    $region4: #{tpu_custom_call.1} parent=1 // pred_region
      %s11 = ssub.s32 384, 384
      %12 = vsyncadd [#allocation3], %s11
      %s13 = sshll.u32 [#allocation2], 4
      %s14 = int_to_ptr.vmem [resolvable:$true] %s13
      %19 = dma.hbm_to_vmem [thread:$0]  %s0, 384, %s14, [#allocation3], 128, 128, 8
    $region5: #{tpu_custom_call.1} parent=1 // pred_fallthru
      _
    // Predicated region
    $region6: #{tpu_custom_call.1} parent=1 // pred_check
      _
    $region7: #{tpu_custom_call.1} parent=1 // pred_check_branch
      %21 = sbr.rel (0) target = $region9
    $region8: #{tpu_custom_call.1} parent=1 // pred_region
      %22 = dma.done [#allocation3], 384
    $region9: #{tpu_custom_call.1} parent=1 // pred_fallthru
      _
    %v23 = vld [vmem:[#allocation2] sm:$0xff]
    %v24 = vld [vmem:[#allocation2 + $0x8] sm:$0xff]
    %v25 = vld [vmem:[#allocation2 + $0x10] sm:$0xff]
    %vm26 = vcmask 261120
    %v28 = vsel %vm26, %v23, 0
    %v31 = vsel %vm26, %v24, 0
    %v34 = vsel %vm26, %v25, 0
    %36 = vmatprep.subr.mxu0 0.0
    %37 = vmatpush1.xpose.msra.mxu0 0.0
    %38 = vmatprep.subr.mxu0 0.0
    %39 = vmatpush1.xpose.msra.mxu0 0.0
    %40 = vmatprep.subr.mxu0 0.0
    %41 = vmatpush1.xpose.msra.mxu0 0.0
    %42 = vmatprep.subr.mxu0 0.0
    %43 = vmatpush1.xpose.msra.mxu0 0.0
    %44 = vmatprep.subr.mxu0 0.0
    %45 = vmatpush1.xpose.msra.mxu0 0.0
    %46 = vmatprep.subr.mxu0 0.0
    %47 = vmatpush1.xpose.msra.mxu0 0.0
    %48 = vmatprep.subr.mxu0 0.0
    %49 = vmatpush1.xpose.msra.mxu0 0.0
    %50 = vmatprep.subr.mxu0 0.0
    %51 = vmatpush1.xpose.msra.mxu0 0.0
    %52 = vmatprep.subr.mxu0 0.0
    %53 = vmatpush1.xpose.msra.mxu0 0.0
    %54 = vmatprep.subr.mxu0 0.0
    %55 = vmatpush1.xpose.msra.mxu0 0.0
    %56 = vmatprep.subr.mxu0 0.0
    %57 = vmatpush1.xpose.msra.mxu0 0.0
    %58 = vmatprep.subr.mxu0 0.0
    %59 = vmatpush1.xpose.msra.mxu0 0.0
    %60 = vmatprep.subr.mxu0 0.0
    %61 = vmatpush1.xpose.msra.mxu0 0.0
    %62 = vmatprep.subr.mxu0 0.0
    %63 = vmatpush1.xpose.msra.mxu0 0.0
    %64 = vmatprep.subr.mxu0 0.0
    %65 = vmatpush1.xpose.msra.mxu0 %v34
    %66 = vmatprep.subr.mxu0 0.0
    %67 = vmatpush1.xpose.msra.mxu0 %v31
    %68 = vmatprep.subr.mxu0 0.0
    %69 = vmatpush2.xpose.msra.mxu0 0.0
    %70 = vmatprep.subr.mxu0 0.0
    %71 = vmatpush2.xpose.msra.mxu0 0.0
    %72 = vmatprep.subr.mxu0 0.0
    %73 = vmatpush2.xpose.msra.mxu0 0.0
    %74 = vmatprep.subr.mxu0 0.0
    %75 = vmatpush2.xpose.msra.mxu0 0.0
    %76 = vmatprep.subr.mxu0 0.0
    %77 = vmatpush2.xpose.msra.mxu0 0.0
    %78 = vmatprep.subr.mxu0 0.0
    %79 = vmatpush2.xpose.msra.mxu0 0.0
    %80 = vmatprep.subr.mxu0 0.0
    %81 = vmatpush2.xpose.msra.mxu0 0.0
    %82 = vmatprep.subr.mxu0 0.0
    %83 = vmatpush2.xpose.msra.mxu0 0.0
    %84 = vmatprep.subr.mxu0 0.0
    %85 = vmatpush2.xpose.msra.mxu0 0.0
    %86 = vmatprep.subr.mxu0 0.0
    %87 = vmatpush2.xpose.msra.mxu0 0.0
    %88 = vmatprep.subr.mxu0 0.0
    %89 = vmatpush2.xpose.msra.mxu0 0.0
    %90 = vmatprep.subr.mxu0 0.0
    %91 = vmatpush2.xpose.msra.mxu0 0.0
    %92 = vmatprep.subr.mxu0 0.0
    %93 = vmatpush2.xpose.msra.mxu0 0.0
    %94 = vmatprep.subr.mxu0 0.0
    %95 = vmatpush2.xpose.msra.mxu0 0.0
    %96 = vmatprep.subr.mxu0 0.0
    %97 = vmatpush2.xpose.msra.mxu0 0.0
    %98 = vmatprep.subr.mxu0 0.0
    %99 = vmatpush2.xpose.msra.mxu0 0.0
    %100 = vmatprep.mubr.f32.mxu0 0.0
    %101 = vmatmul.mubr.f32.gmra.mxu0 %v28
    %v102 = vpop.f32.mrf.mxu0
    %v103 = vadd.f32 0.0, %v102
    %v104 = vpop.f32.mrf.mxu0
    %105 = vdwg.mxu0
    %v106 = vmul.f32 %v103, 14.285714
    %vm107 = vcmask 64512
    %v108 = vsel %vm107, %v106, -inf
    %109 = vmax.xlane.f32.xlu0 %v108
    %v110 = vpop.xlane.xlu0 %109
    %v111 = vsub.f32 %v106, %v110
    %v112 = vmul.f32 %v111, 1.442695
    %v113 = vpow.pop %v112
    %vm114 = vcmask 130112
    %v115 = vsel %vm114, %v106, -inf
    %116 = vmax.xlane.f32.xlu0 %v115
    %v117 = vpop.xlane.xlu0 %116
    %v118 = vsub.f32 %v106, %v117
    %v119 = vmul.f32 %v118, 1.442695
    %v120 = vpow.pop %v119
    %122 = vrot.lane.b32.xlu0 %v120, 120
    %v123 = vpop.permute.xlu0 %122
    %v125 = vsel %vm107, %v123, 0.0
    %126 = vadd.xlane.f32.xlu0 %v125
    %v127 = vpop.xlane.xlu0 %126
    %v128 = vlog2.pop %v127
    %v129 = vmul.f32 %v128, 0.6931472
    %131 = vrot.lane.b32.xlu0 %v118, 120
    %v132 = vpop.permute.xlu0 %131
    %v134 = vmul.f32 %v113, %v132
    %v135 = vsel %vm107, %v134, 0.0
    %136 = vadd.xlane.f32.xlu0 %v135
    %v137 = vpop.xlane.xlu0 %136
    %v138 = vsel %vm107, %v113, 0.0
    %139 = vadd.xlane.f32.xlu0 %v138
    %v140 = vpop.xlane.xlu0 %139
    %v141 = vrcp.pop %v140
    %v142 = vmul.f32 %v137, %v141
    %v143 = vsub.f32 %v142, %v129
    %v144 = vrot.slane %v108, 4
    %v145 = vmax.f32 %v108, %v144
    %v146 = vrot.slane %v145, 2
    %v147 = vmax.f32 %v145, %v146
    %v148 = vrot.slane %v147, 1
    %v149 = vmax.f32 %v147, %v148
    %v150 = vsub.f32 %v106, %v149
    %v151 = vmul.f32 %v150, 1.442695
    %v152 = vpow.pop %v151
    %v153 = vrot.slane %v115, 4
    %v154 = vmax.f32 %v115, %v153
    %v155 = vrot.slane %v154, 2
    %v156 = vmax.f32 %v154, %v155
    %v157 = vrot.slane %v156, 1
    %v158 = vmax.f32 %v156, %v157
    %v159 = vsub.f32 %v106, %v158
    %v160 = vmul.f32 %v159, 1.442695
    %v161 = vpow.pop %v160
    %v162 = vsel %vm114, %v161, 0.0
    %v163 = vrot.slane %v162, 4
    %v164 = vadd.f32 %v162, %v163
    %v165 = vrot.slane %v164, 2
    %v166 = vadd.f32 %v164, %v165
    %v167 = vrot.slane %v166, 1
    %v168 = vadd.f32 %v166, %v167
    %v169 = vlog2.pop %v168
    %v170 = vmul.f32 %v169, 0.6931472
    %172 = vrot.lane.b32.xlu0 %v159, 120
    %v173 = vpop.permute.xlu0 %172
    %v175 = vmul.f32 %v152, %v173
    %v176 = vsel %vm107, %v175, 0.0
    %v177 = vrot.slane %v176, 4
    %v178 = vadd.f32 %v176, %v177
    %v179 = vrot.slane %v178, 2
    %v180 = vadd.f32 %v178, %v179
    %v181 = vrot.slane %v180, 1
    %v182 = vadd.f32 %v180, %v181
    %v183 = vsel %vm107, %v152, 0.0
    %v184 = vrot.slane %v183, 4
    %v185 = vadd.f32 %v183, %v184
    %v186 = vrot.slane %v185, 2
    %v187 = vadd.f32 %v185, %v186
    %v188 = vrot.slane %v187, 1
    %v189 = vadd.f32 %v187, %v188
    %v190 = vrcp.pop %v189
    %v191 = vmul.f32 %v182, %v190
    %193 = vrot.lane.b32.xlu0 %v170, 120
    %v194 = vpop.permute.xlu0 %193
    %v196 = vsub.f32 %v191, %v194
    %vm197 = vcmask 7168
    %v198 = vsel %vm197, %v143, 0.0
    %199 = vadd.xlane.f32.xlu0 %v198
    %v200 = vpop.xlane.xlu0 %199
    %v201 = vrot.slane %v200, 4
    %v202 = vadd.f32 %v200, %v201
    %v203 = vrot.slane %v202, 2
    %v204 = vadd.f32 %v202, %v203
    %v205 = vrot.slane %v204, 1
    %v206 = vadd.f32 %v204, %v205
    %s207 = vtos %v206
    %vm208 = vcmask 57344
    %v209 = vsel %vm208, %v196, 0.0
    %210 = vadd.xlane.f32.xlu0 %v209
    %v211 = vpop.xlane.xlu0 %210
    %v212 = vrot.slane %v211, 4
    %v213 = vadd.f32 %v211, %v212
    %v214 = vrot.slane %v213, 2
    %v215 = vadd.f32 %v213, %v214
    %v216 = vrot.slane %v215, 1
    %v217 = vadd.f32 %v215, %v216
    %s218 = vtos %v217
    %s219 = sadd.f32 %s207, %s218
    %s220 = smul.f32 %s219, -0.0625
    %s221 = scalar_lea.smem [#allocation5], 0
    %222 = sst [smem:[%s221]] %s220
    // Predicated region
    $region10: #{tpu_custom_call.1} parent=1 // pred_check
      _
    $region11: #{tpu_custom_call.1} parent=1 // pred_check_branch
      %224 = sbr.rel (0) target = $region13
    $region12: #{tpu_custom_call.1} parent=1 // pred_region
      %s226 = ssub.s32 16, 16
      %227 = vsyncadd [#allocation4], %s226
      %230 = dma.smem_to_hbm [#allocation5], 16, %s1, [#allocation4]
    $region13: #{tpu_custom_call.1} parent=1 // pred_fallthru
      _
    // Predicated region
    $region14: #{tpu_custom_call.1} parent=1 // pred_check
      _
    $region15: #{tpu_custom_call.1} parent=1 // pred_check_branch
      %232 = sbr.rel (0) target = $region17
    $region16: #{tpu_custom_call.1} parent=1 // pred_region
      %233 = dma.done [#allocation4], 16
    $region17: #{tpu_custom_call.1} parent=1 // pred_fallthru
      _
    %234 = sfence
    %235 = vsyncpa [#allocation3], 1
    %236 = vsyncpa [#allocation4], 1

</llo_original>
